<compile_context>
chip_gen: v5e
topology: v5e:2x2
jax: 0.10.0
libtpu: 0.0.40
codegen_flags: <defaults>
</compile_context>

<pallas_src>
import jax
import jax.numpy as jnp
from jax.experimental import pallas as pl
from jax.experimental.pallas import tpu as pltpu


def _binary_classifier_kernel(x_ref, w_ref, b_ref, o_ref):
    # x_ref: (tile_r, 128) f32 -- 16 samples x 8 features per row (batch lane-dense).
    # w_ref: (128, 16)     f32 -- block-diagonal weight, resident across grid steps.
    # b_ref: (1,)          f32 -- scalar bias in SMEM.
    # o_ref: (tile_r, 16)  f32 -- one probability per sample (row-major == (16*tile_r, 1)).
    z = jnp.dot(x_ref[...], w_ref[...], preferred_element_type=jnp.float32)
    z = z + b_ref[0]
    # sigmoid(z) = 0.5 * tanh(z/2) + 0.5  -> tanh runs on the EUP (free slot),
    # no full-precision VPU divide; numerically matches XLA's logistic expansion.
    o_ref[...] = (0.5 * jnp.tanh(0.5 * z) + 0.5).astype(o_ref.dtype)


def binary_classifier(x, w, b, *, tile_b=None):
    """sigmoid(x @ w + b), i.e. the PyTorch BinaryClassifier forward.

    x: (B, 8) f32, w: (8, 1) f32 (= linear.weight.T), b: (1,) f32 -> (B, 1) f32.
    """
    B, D = x.shape
    assert D == 8
    assert w.shape == (D, 1)

    # Pad the batch (rows only) to a multiple of 128 so the (B,8)->(B/16,128)
    # reshape is a zero-copy row-major bitcast and rows stay sublane-aligned.
    # No-op for aligned batches; otherwise it touches < 128 extra rows (~4 KiB).
    Bp = ((B + 127) // 128) * 128
    if Bp != B:
        x = jnp.pad(x, ((0, Bp - B), (0, 0)))
    R = Bp // 16                    # rows of the lane-dense view (multiple of 8)
    xr = x.reshape(R, 128)          # zero-copy: batch on lanes, 16 samples/row

    # Tile size in samples: aim for >= ~8 grid steps (v7x dual-TC sharding +
    # pipeline depth), cap the x block at 4 MiB (131072 samples) so the
    # double-buffered working set (~10 MiB) fits VMEM on v5e/v6e/v7x.
    if tile_b is None:
        target = ((Bp // 8 + 127) // 128) * 128
        tile_b = max(128, min(131072, target))
    tile_b = ((min(tile_b, Bp) + 127) // 128) * 128   # multiple of 128 samples
    tile_r = tile_b // 16                             # rows per step (multiple of 8)
    grid = (pl.cdiv(R, tile_r),)                      # ragged last block handled by Pallas

    # Block-diagonal weight: W_bd[8*j + k, j] = w[k].  Tiny (8 KiB), built once
    # per call; stays resident in VMEM (same block every grid step).
    w_bd = jnp.kron(jnp.eye(16, dtype=x.dtype), w.astype(x.dtype))   # (128, 16)

    out = pl.pallas_call(
        _binary_classifier_kernel,
        out_shape=jax.ShapeDtypeStruct((R, 16), x.dtype),
        grid_spec=pltpu.PrefetchScalarGridSpec(
            num_scalar_prefetch=0,
            grid=grid,
            in_specs=[
                # x tiles: (tile_r, 128) marching down the batch/row axis.
                pl.BlockSpec((tile_r, 128), lambda i: (i, 0)),
                # block-diagonal weight: resident (same block -> no re-DMA).
                pl.BlockSpec((128, 16), lambda i: (0, 0)),
                # bias: scalar in SMEM (no tiny VMEM DMA / broadcast block).
                pl.BlockSpec(memory_space=pltpu.MemorySpace.SMEM),
            ],
            out_specs=pl.BlockSpec((tile_r, 16), lambda i: (i, 0)),
        ),
        compiler_params=pltpu.CompilerParams(
            dimension_semantics=("parallel",),
            vmem_limit_bytes=32 * 1024 * 1024,   # v5e scoped default is only 16 MiB
        ),
        cost_estimate=pl.CostEstimate(
            flops=17 * B,            # 8 mul + 8 add + bias per sample
            transcendentals=B,       # one tanh per sample
            bytes_accessed=36 * B,   # 32 B read + 4 B written per sample
        ),
    )(xr, w_bd, b)

    # (R, 16) -> (Bp, 1) is a free row-major bitcast; slice drops padded rows.
    return out.reshape(Bp, 1)[:B]


if __name__ == "__main__":
    key = jax.random.PRNGKey(0)
    kx, kw, kb, kx2 = jax.random.split(key, 4)

    D = 8  # in_features from nn.Linear(8, 1)
    # Deterministic params (mimics nn.Linear's uniform(-1/sqrt(8), 1/sqrt(8))).
    bound = 1.0 / jnp.sqrt(jnp.float32(D))
    w = jax.random.uniform(kw, (D, 1), minval=-bound, maxval=bound, dtype=jnp.float32)
    b = jax.random.uniform(kb, (1,), minval=-bound, maxval=bound, dtype=jnp.float32)

    fwd = jax.jit(binary_classifier)

    # Small-batch check (single grid step, padded-row path).
    B = 16
    x = jax.random.normal(kx, (B, D), dtype=jnp.float32)
    out = jax.block_until_ready(fwd(x, w, b))
    ref = jax.nn.sigmoid(x @ w + b.reshape(1, 1))
    assert out.shape == (B, 1)
    assert jnp.allclose(out, ref, atol=1e-5, rtol=1e-5)

    # Multi-tile check (exercises the batch grid + unaligned-batch path).
    B2 = 200
    x2 = jax.random.normal(kx2, (B2, D), dtype=jnp.float32)
    out2 = jax.block_until_ready(binary_classifier(x2, w, b, tile_b=128))
    ref2 = jax.nn.sigmoid(x2 @ w + b.reshape(1, 1))
    assert out2.shape == (B2, 1)
    assert jnp.allclose(out2, ref2, atol=1e-5, rtol=1e-5)

    print("KERNEL_OK")
</pallas_src>

<mosaic_0001>
module attributes {stable_mosaic.version = 11 : i64} {
  func.func @_binary_classifier_kernel(%arg0: i32, %arg1: memref<8x128xf32, #tpu.memory_space<vmem>>, %arg2: memref<128x16xf32, #tpu.memory_space<vmem>>, %arg3: memref<1xf32, #tpu.memory_space<smem>>, %arg4: memref<8x16xf32, #tpu.memory_space<vmem>>) attributes {dimension_semantics = [#tpu.dimension_semantics<parallel>], iteration_bounds = array<i64: 1>, scalar_prefetch = 0 : i64, scratch_operands = 0 : i64, tpu.core_type = #tpu.core_type<tc>, window_params = [{transform_indices = @transform_0, window_bounds = array<i64: 8, 128>}, {pipeline_mode = #tpu.pipeline_mode<synchronous>, transform_indices = @transform_1, window_bounds = array<i64: 128, 16>}, {transform_indices = @transform_2, window_bounds = array<i64: 1>}, {transform_indices = @transform_3, window_bounds = array<i64: 8, 16>}]} {
    %c0 = arith.constant 0 : index
    %c0_0 = arith.constant 0 : index
    %0 = vector.load %arg1[%c0, %c0_0] : memref<8x128xf32, #tpu.memory_space<vmem>>, vector<8x128xf32>
    %c0_1 = arith.constant 0 : index
    %c0_2 = arith.constant 0 : index
    %1 = vector.load %arg2[%c0_1, %c0_2] : memref<128x16xf32, #tpu.memory_space<vmem>>, vector<128x16xf32>
    %cst = arith.constant dense<0.000000e+00> : vector<8x16xf32>
    %2 = tpu.matmul %0, %1, %cst {dimension_numbers = #tpu.dot_dimension_numbers<[1], [0], [0], [1], [0, 0, 1, 1], [], []>} : vector<8x128xf32>, vector<128x16xf32>, vector<8x16xf32> -> vector<8x16xf32>
    %c0_3 = arith.constant 0 : index
    %3 = memref.load %arg3[%c0_3] : memref<1xf32, #tpu.memory_space<smem>>
    %4 = vector.broadcast %3 : f32 to vector<8x16xf32>
    %5 = arith.addf %2, %4 : vector<8x16xf32>
    %cst_4 = arith.constant 5.000000e-01 : f32
    %6 = vector.broadcast %cst_4 : f32 to vector<8x16xf32>
    %7 = arith.mulf %6, %5 : vector<8x16xf32>
    %8 = math.tanh %7 : vector<8x16xf32>
    %cst_5 = arith.constant 5.000000e-01 : f32
    %9 = vector.broadcast %cst_5 : f32 to vector<8x16xf32>
    %10 = arith.mulf %9, %8 : vector<8x16xf32>
    %cst_6 = arith.constant 5.000000e-01 : f32
    %11 = vector.broadcast %cst_6 : f32 to vector<8x16xf32>
    %12 = arith.addf %10, %11 : vector<8x16xf32>
    %c0_7 = arith.constant 0 : index
    %c0_8 = arith.constant 0 : index
    %13 = vector.load %arg4[%c0_7, %c0_8] : memref<8x16xf32, #tpu.memory_space<vmem>>, vector<8x16xf32>
    tpu.vector_store %arg4[%c0_7, %c0_8], %12 {strides = array<i32>} : memref<8x16xf32, #tpu.memory_space<vmem>>, vector<8x16xf32>,
    return
  }
  func.func @transform_0(%arg0: i32) -> (i32, i32) {
    %c0_i32 = arith.constant 0 : i32
    %c0_i32_0 = arith.constant 0 : i32
    return %arg0, %c0_i32 : i32, i32
  }
  func.func @transform_1(%arg0: i32) -> (i32, i32) {
    %c0_i32 = arith.constant 0 : i32
    %c0_i32_0 = arith.constant 0 : i32
    %c0_i32_1 = arith.constant 0 : i32
    return %c0_i32, %c0_i32_0 : i32, i32
  }
  func.func @transform_2(%arg0: i32) -> i32 {
    %c0_i32 = arith.constant 0 : i32
    %c0_i32_0 = arith.constant 0 : i32
    return %c0_i32 : i32
  }
  func.func @transform_3(%arg0: i32) -> (i32, i32) {
    %c0_i32 = arith.constant 0 : i32
    %c0_i32_0 = arith.constant 0 : i32
    return %arg0, %c0_i32 : i32, i32
  }
}

</mosaic_0001>

<llo_original>
// kernel: binary_classifier.1
$region0: #{binary_classifier.1}
  #allocation0 [shape = 'u32[]', space=smem, size = 0x4, offset = 0x4, fixed_abs, tag = 'smem constant byte address 0x4 - core index']
  #allocation1 [shape = 'u32[72,128]{1,0:T(1,128)}', space=vmem, size = 0x9000, scoped, tag = 'internal scratch']
  #allocation2 [shape = 'f32[1]{0:T(128)S(6)}', space=smem, size = 0x200, scoped, tag = 'scoped memory for binary_classifier.1']
  %s0 = inlined_call_operand.vmem [shape: f32[8,128], index: 0, kind: input, shape index: {}]
  %s1 = inlined_call_operand.vmem [shape: f32[128,16], index: 1, kind: input, shape index: {}]
  %s2 = inlined_call_operand.<no memory space> [shape: f32[1], index: 2, kind: input, shape index: {}]
  %s3 = inlined_call_operand.vmem [shape: f32[8,16], index: 3, kind: output, shape index: {}]
  %s4 = sld [smem:[#allocation0]]
  $region22: #{binary_classifier.1} parent=0
    _
  %s6 = ssub.s32 1, %s4
  %s7 = scalar_select 0, %s6, %s4
  %8 = sst [smem:[#allocation2]] %s2
  // Predicated region
  $region2: #{binary_classifier.1} parent=0 // pred_check
    _
  $region3: #{binary_classifier.1} parent=0 // pred_check_branch
    %10 = sbr.rel (0) target = $region5
  $region4: #{binary_classifier.1} parent=0 // pred_region
    _
  $region5: #{binary_classifier.1} parent=0 // pred_fallthru
    _
  // Predicated region
  $region6: #{binary_classifier.1} parent=0 // pred_check
    _
  $region7: #{binary_classifier.1} parent=0 // pred_check_branch
    %12 = sbr.rel (0) target = $region9
  $region8: #{binary_classifier.1} parent=0 // pred_region
    _
  $region9: #{binary_classifier.1} parent=0 // pred_fallthru
    _
  // Predicated region
  $region10: #{binary_classifier.1} parent=0 // pred_check
    _
  $region11: #{binary_classifier.1} parent=0 // pred_check_branch
    %14 = sbr.rel (0) target = $region13
  $region12: #{binary_classifier.1} parent=0 // pred_region
    _
  $region13: #{binary_classifier.1} parent=0 // pred_fallthru
    _
  %v15 = vld [vmem:[%s0] sm:$0xff]
  %v16 = vld [vmem:[%s1] sm:$0xff]
  %v17 = vld [vmem:[%s1 + $0x8] sm:$0xff]
  %v18 = vld [vmem:[%s1 + $0x10] sm:$0xff]
  %v19 = vld [vmem:[%s1 + $0x18] sm:$0xff]
  %v20 = vld [vmem:[%s1 + $0x20] sm:$0xff]
  %v21 = vld [vmem:[%s1 + $0x28] sm:$0xff]
  %v22 = vld [vmem:[%s1 + $0x30] sm:$0xff]
  %v23 = vld [vmem:[%s1 + $0x38] sm:$0xff]
  %v24 = vld [vmem:[%s1 + $0x40] sm:$0xff]
  %v25 = vld [vmem:[%s1 + $0x48] sm:$0xff]
  %v26 = vld [vmem:[%s1 + $0x50] sm:$0xff]
  %v27 = vld [vmem:[%s1 + $0x58] sm:$0xff]
  %v28 = vld [vmem:[%s1 + $0x60] sm:$0xff]
  %v29 = vld [vmem:[%s1 + $0x68] sm:$0xff]
  %v30 = vld [vmem:[%s1 + $0x70] sm:$0xff]
  %v31 = vld [vmem:[%s1 + $0x78] sm:$0xff]
  %s32 = sld [smem:[#allocation2]]
  %v33 = vstv %s32
  %34 = vmatpush.msra.mxu0 %v31
  %35 = vmatpush.msra.mxu0 %v30
  %36 = vmatpush.msra.mxu0 %v29
  %37 = vmatpush.msra.mxu0 %v28
  %38 = vmatpush.msra.mxu0 %v27
  %39 = vmatpush.msra.mxu0 %v26
  %40 = vmatpush.msra.mxu0 %v25
  %41 = vmatpush.msra.mxu0 %v24
  %42 = vmatpush.msra.mxu0 %v23
  %43 = vmatpush.msra.mxu0 %v22
  %44 = vmatpush.msra.mxu0 %v21
  %45 = vmatpush.msra.mxu0 %v20
  %46 = vmatpush.msra.mxu0 %v19
  %47 = vmatpush.msra.mxu0 %v18
  %48 = vmatpush.msra.mxu0 %v17
  %49 = vmatpush.msra.mxu0 %v16
  %50 = vmatmul.f32.gmra.mxu0 %v15
  %v51 = vpop.f32.mrf.mxu0
  %v52 = vadd.f32 %v33, %v51
  %53 = vdwg.mxu0
  %v54 = vmul.f32 %v52, 0.5
  %v55 = vtanh.pop %v54
  %v56 = vmul.f32 %v55, 0.5
  %v57 = vadd.f32 %v56, 0.5
  %vm58 = vcmask 130048
  %59 = vst.msk [vmem:[%s3] sm:$0xff] %vm58, %v57
  // Predicated region
  $region14: #{binary_classifier.1} parent=0 // pred_check
    _
  $region15: #{binary_classifier.1} parent=0 // pred_check_branch
    %61 = sbr.rel (0) target = $region17
  $region16: #{binary_classifier.1} parent=0 // pred_region
    _
  $region17: #{binary_classifier.1} parent=0 // pred_fallthru
    _
  // Predicated region
  $region18: #{binary_classifier.1} parent=0 // pred_check
    _
  $region19: #{binary_classifier.1} parent=0 // pred_check_branch
    %63 = sbr.rel (0) target = $region21
  $region20: #{binary_classifier.1} parent=0 // pred_region
    _
  $region21: #{binary_classifier.1} parent=0 // pred_fallthru
    _

</llo_original>
